<compile_context>
chip_gen: v6e
topology: v6e:2x2x1
jax: 0.10.0
libtpu: 0.0.40
codegen_flags: <defaults>
</compile_context>

<pallas_src>
import jax
import jax.numpy as jnp
from jax.experimental import pallas as pl
from jax.experimental.pallas import tpu as pltpu


def koopman_forward_kernel(x_ref, w1_ref, b1_ref, w2_ref, b2_ref, out_ref):
    """out_tile = concat([x_tile, Linear2(Mish(Linear1(x_tile)))], axis=-1)

    x_ref  : (tile_b, nx)     VMEM   (streams per grid step)
    w1_ref : (nx, H)          VMEM   (resident; transposed vs torch (H, nx))
    b1_ref : (1, H)           VMEM   (resident)
    w2_ref : (H, nz-nx)       VMEM   (resident)
    b2_ref : (1, nz-nx)       VMEM   (resident)
    out_ref: (tile_b, nz)     VMEM   (streams per grid step)
    """
    x = x_ref[...].astype(jnp.float32)

    # Linear 1 (MXU) + bias.
    h = jnp.dot(x, w1_ref[...], preferred_element_type=jnp.float32) + b1_ref[...]

    # Mish(h) = h * tanh(softplus(h)).  With u = exp(h):
    #   tanh(log1p(u)) = u*(u+2) / (u*(u+2) + 2)
    # -> 1 EUP exp + 1 EUP approx reciprocal instead of exp + log1p + tanh.
    # Clamp h at 20: there tanh(softplus(h)) == 1.0 in f32 and exp() cannot
    # overflow; for very negative h, exp underflows harmlessly to 0.
    u = jnp.exp(jnp.minimum(h, 20.0))
    num = u * (u + 2.0)
    t = num * pl.reciprocal(num + 2.0, approx=True)
    h = h * t

    # Linear 2 (MXU) + bias.
    e = jnp.dot(h, w2_ref[...], preferred_element_type=jnp.float32) + b2_ref[...]

    # Single fused store of the concatenated result (one store sequence
    # instead of two masked partial stores at lane offsets 0 and nx).
    out_ref[...] = jnp.concatenate([x, e], axis=-1).astype(out_ref.dtype)


def koopman_forward(x, w1, b1, w2, b2, *, tile_b=1024):
    """x: (B, nx) f32; weights stored input-major so the kernel does x @ W.

    Returns concat([x, encoder(x)], -1) of shape (B, nx + w2.shape[1]).
    """
    B, nx = x.shape
    H = w1.shape[1]
    ne = w2.shape[1]          # nz - nx
    nz = nx + ne

    # Batch tile: multiple of 8 (sublane), no bigger than the (padded) batch.
    b_aligned = max(8, ((B + 7) // 8) * 8)
    tile_b = min(tile_b, b_aligned)
    Bp = ((B + tile_b - 1) // tile_b) * tile_b
    if Bp != B:
        x = jnp.pad(x, ((0, Bp - B), (0, 0)))  # zero rows flow through safely

    out = pl.pallas_call(
        koopman_forward_kernel,
        out_shape=jax.ShapeDtypeStruct((Bp, nz), jnp.float32),
        grid=(Bp // tile_b,),
        in_specs=[
            # x streams one batch tile per grid step.
            pl.BlockSpec((tile_b, nx), lambda i: (i, 0)),
            # Weights / biases: constant index map -> resident in VMEM,
            # not re-DMA'd per step.
            pl.BlockSpec((nx, H), lambda i: (0, 0)),
            pl.BlockSpec((1, H), lambda i: (0, 0)),
            pl.BlockSpec((H, ne), lambda i: (0, 0)),
            pl.BlockSpec((1, ne), lambda i: (0, 0)),
        ],
        out_specs=pl.BlockSpec((tile_b, nz), lambda i: (i, 0)),
        compiler_params=pltpu.CompilerParams(
            dimension_semantics=("parallel",)),
    )(x, w1, b1, w2, b2)

    return out[:B]


def init_params(key, nx, nz, hidden):
    """Deterministic synthetic init matching the torch encoder MLP shapes:
    Linear(nx->hidden), Mish, Linear(hidden->nz-nx).
    (Q, C, B, Cs, P exist in the torch module but are unused in forward.)"""
    k1, k2, k3, k4 = jax.random.split(key, 4)
    lim1 = 1.0 / jnp.sqrt(nx)
    lim2 = 1.0 / jnp.sqrt(hidden)
    w1 = jax.random.uniform(k1, (nx, hidden), jnp.float32, -lim1, lim1)
    b1 = jax.random.uniform(k2, (1, hidden), jnp.float32, -lim1, lim1)
    w2 = jax.random.uniform(k3, (hidden, nz - nx), jnp.float32, -lim2, lim2)
    b2 = jax.random.uniform(k4, (1, nz - nx), jnp.float32, -lim2, lim2)
    return w1, b1, w2, b2


def reference_forward(x, w1, b1, w2, b2):
    """Pure-JAX reference (exact Mish via softplus/tanh)."""
    h = x @ w1 + b1
    h = h * jnp.tanh(jax.nn.softplus(h))  # Mish
    e = h @ w2 + b2
    return jnp.concatenate([x, e], axis=-1)


if __name__ == "__main__":
    # Shapes consistent with the module: nx=4 states, nz=8 latent,
    # hidden_dims=[64] (module default).  Batch chosen non-multiple of the
    # tile to exercise both the grid and the padding path.
    nx, nz, hidden, batch = 4, 8, 64, 1000
    tile_b = 256  # -> padded to 1024 rows, grid of 4 steps

    key = jax.random.PRNGKey(0)
    kx, kp = jax.random.split(key)
    x = jax.random.normal(kx, (batch, nx), jnp.float32)
    w1, b1, w2, b2 = init_params(kp, nx, nz, hidden)

    out = koopman_forward(x, w1, b1, w2, b2, tile_b=tile_b)
    out = jax.block_until_ready(out)

    ref = reference_forward(x, w1, b1, w2, b2)
    assert out.shape == (batch, nz), out.shape
    # Tolerance accounts for the approx-EUP reciprocal in the Mish rewrite.
    assert jnp.allclose(out, ref, atol=5e-3, rtol=5e-3), (
        float(jnp.max(jnp.abs(out - ref))))

    print("KERNEL_OK")
</pallas_src>

<mosaic_0001>
module attributes {stable_mosaic.version = 11 : i64} {
  func.func @koopman_forward_kernel(%arg0: i32, %arg1: memref<256x4xf32, #tpu.memory_space<vmem>>, %arg2: memref<4x64xf32, #tpu.memory_space<vmem>>, %arg3: memref<1x64xf32, #tpu.memory_space<vmem>>, %arg4: memref<64x4xf32, #tpu.memory_space<vmem>>, %arg5: memref<1x4xf32, #tpu.memory_space<vmem>>, %arg6: memref<256x8xf32, #tpu.memory_space<vmem>>) attributes {dimension_semantics = [#tpu.dimension_semantics<parallel>], iteration_bounds = array<i64: 4>, scalar_prefetch = 0 : i64, scratch_operands = 0 : i64, tpu.core_type = #tpu.core_type<tc>, window_params = [{transform_indices = @transform_0, window_bounds = array<i64: 256, 4>}, {pipeline_mode = #tpu.pipeline_mode<synchronous>, transform_indices = @transform_1, window_bounds = array<i64: 4, 64>}, {pipeline_mode = #tpu.pipeline_mode<synchronous>, transform_indices = @transform_2, window_bounds = array<i64: 1, 64>}, {pipeline_mode = #tpu.pipeline_mode<synchronous>, transform_indices = @transform_3, window_bounds = array<i64: 64, 4>}, {pipeline_mode = #tpu.pipeline_mode<synchronous>, transform_indices = @transform_4, window_bounds = array<i64: 1, 4>}, {transform_indices = @transform_5, window_bounds = array<i64: 256, 8>}]} {
    %c0 = arith.constant 0 : index
    %c0_0 = arith.constant 0 : index
    %0 = vector.load %arg1[%c0, %c0_0] : memref<256x4xf32, #tpu.memory_space<vmem>>, vector<256x4xf32>
    %c0_1 = arith.constant 0 : index
    %c0_2 = arith.constant 0 : index
    %1 = vector.load %arg2[%c0_1, %c0_2] : memref<4x64xf32, #tpu.memory_space<vmem>>, vector<4x64xf32>
    %cst = arith.constant dense<0.000000e+00> : vector<256x64xf32>
    %2 = tpu.matmul %0, %1, %cst {dimension_numbers = #tpu.dot_dimension_numbers<[1], [0], [0], [1], [0, 0, 1, 1], [], []>} : vector<256x4xf32>, vector<4x64xf32>, vector<256x64xf32> -> vector<256x64xf32>
    %c0_3 = arith.constant 0 : index
    %c0_4 = arith.constant 0 : index
    %3 = vector.load %arg3[%c0_3, %c0_4] : memref<1x64xf32, #tpu.memory_space<vmem>>, vector<1x64xf32>
    %4 = vector.broadcast %3 : vector<1x64xf32> to vector<256x64xf32>
    %5 = arith.addf %2, %4 : vector<256x64xf32>
    %cst_5 = arith.constant 2.000000e+01 : f32
    %6 = vector.broadcast %cst_5 : f32 to vector<256x64xf32>
    %7 = arith.minimumf %5, %6 : vector<256x64xf32>
    %8 = math.exp %7 : vector<256x64xf32>
    %cst_6 = arith.constant 2.000000e+00 : f32
    %9 = vector.broadcast %cst_6 : f32 to vector<256x64xf32>
    %10 = arith.addf %8, %9 : vector<256x64xf32>
    %11 = arith.mulf %8, %10 : vector<256x64xf32>
    %cst_7 = arith.constant 2.000000e+00 : f32
    %12 = vector.broadcast %cst_7 : f32 to vector<256x64xf32>
    %13 = arith.addf %11, %12 : vector<256x64xf32>
    %14 = tpu.reciprocal %13 {approx = true} : vector<256x64xf32> -> vector<256x64xf32>
    %15 = arith.mulf %11, %14 : vector<256x64xf32>
    %16 = arith.mulf %5, %15 : vector<256x64xf32>
    %c0_8 = arith.constant 0 : index
    %c0_9 = arith.constant 0 : index
    %17 = vector.load %arg4[%c0_8, %c0_9] : memref<64x4xf32, #tpu.memory_space<vmem>>, vector<64x4xf32>
    %cst_10 = arith.constant dense<0.000000e+00> : vector<256x4xf32>
    %18 = tpu.matmul %16, %17, %cst_10 {dimension_numbers = #tpu.dot_dimension_numbers<[1], [0], [0], [1], [0, 0, 1, 1], [], []>} : vector<256x64xf32>, vector<64x4xf32>, vector<256x4xf32> -> vector<256x4xf32>
    %c0_11 = arith.constant 0 : index
    %c0_12 = arith.constant 0 : index
    %19 = vector.load %arg5[%c0_11, %c0_12] : memref<1x4xf32, #tpu.memory_space<vmem>>, vector<1x4xf32>
    %20 = vector.broadcast %19 : vector<1x4xf32> to vector<256x4xf32>
    %21 = arith.addf %18, %20 : vector<256x4xf32>
    %22 = tpu.concatenate %0, %21 in 1 : vector<256x4xf32>, vector<256x4xf32> -> vector<256x8xf32>
    %c0_13 = arith.constant 0 : index
    %c0_14 = arith.constant 0 : index
    %23 = vector.load %arg6[%c0_13, %c0_14] : memref<256x8xf32, #tpu.memory_space<vmem>>, vector<256x8xf32>
    tpu.vector_store %arg6[%c0_13, %c0_14], %22 {strides = array<i32>} : memref<256x8xf32, #tpu.memory_space<vmem>>, vector<256x8xf32>,
    return
  }
  func.func @transform_0(%arg0: i32) -> (i32, i32) {
    %c0_i32 = arith.constant 0 : i32
    %c0_i32_0 = arith.constant 0 : i32
    return %arg0, %c0_i32 : i32, i32
  }
  func.func @transform_1(%arg0: i32) -> (i32, i32) {
    %c0_i32 = arith.constant 0 : i32
    %c0_i32_0 = arith.constant 0 : i32
    %c0_i32_1 = arith.constant 0 : i32
    return %c0_i32, %c0_i32_0 : i32, i32
  }
  func.func @transform_2(%arg0: i32) -> (i32, i32) {
    %c0_i32 = arith.constant 0 : i32
    %c0_i32_0 = arith.constant 0 : i32
    %c0_i32_1 = arith.constant 0 : i32
    return %c0_i32, %c0_i32_0 : i32, i32
  }
  func.func @transform_3(%arg0: i32) -> (i32, i32) {
    %c0_i32 = arith.constant 0 : i32
    %c0_i32_0 = arith.constant 0 : i32
    %c0_i32_1 = arith.constant 0 : i32
    return %c0_i32, %c0_i32_0 : i32, i32
  }
  func.func @transform_4(%arg0: i32) -> (i32, i32) {
    %c0_i32 = arith.constant 0 : i32
    %c0_i32_0 = arith.constant 0 : i32
    %c0_i32_1 = arith.constant 0 : i32
    return %c0_i32, %c0_i32_0 : i32, i32
  }
  func.func @transform_5(%arg0: i32) -> (i32, i32) {
    %c0_i32 = arith.constant 0 : i32
    %c0_i32_0 = arith.constant 0 : i32
    return %arg0, %c0_i32 : i32, i32
  }
}

</mosaic_0001>

<llo_original>
// kernel: tpu_custom_call.1
$region0: #{tpu_custom_call.1}
  #allocation0 [shape = 'u32[]', space=smem, size = 0x4, offset = 0x4, fixed_abs, tag = 'smem constant byte address 0x4 - core index']
  #allocation1 [shape = 'u32[144,128]{1,0:T(1,128)}', space=vmem, size = 0x12000, scoped, tag = 'internal scratch']
  %s0 = inlined_call_operand.vmem [shape: f32[1024,4], index: 0, kind: input, shape index: {}]
  %s1 = inlined_call_operand.vmem [shape: f32[4,64], index: 1, kind: input, shape index: {}]
  %s2 = inlined_call_operand.vmem [shape: f32[1,64], index: 2, kind: input, shape index: {}]
  %s3 = inlined_call_operand.vmem [shape: f32[64,4], index: 3, kind: input, shape index: {}]
  %s4 = inlined_call_operand.vmem [shape: f32[1,4], index: 4, kind: input, shape index: {}]
  %s5 = inlined_call_operand.vmem [shape: f32[1024,8], index: 5, kind: output, shape index: {}]
  %s6 = sld [smem:[#allocation0]]
  $region53: #{tpu_custom_call.1} parent=0
    _
  %s8 = ssub.s32 1, %s6
  %s9 = scalar_select 0, %s8, %s6
  loop: start=0, step=1, limit=6
  $region2: #{tpu_custom_call.1} parent=0 // loop_pre_header
    _
  $region3: #{tpu_custom_call.1} parent=0 // loop_header
    %s11 = sphi 0, %s15
    %p12 = scmp.ge.s32.totalorder %s11, 6
    %s21 = sphi 0, %s23
    %s24 = sphi 0, %s21
    %s25 = sphi 0, %s24
    %s41 = sphi 0, %s25
    %s45 = sphi 0, %s45
    %s47 = sphi 0, %s45
    %s48 = sphi 0, %s47
    %s62 = sphi 0, %s48
    %s66 = sphi 0, %s66
    %s68 = sphi 0, %s66
    %s69 = sphi 0, %s68
    %s83 = sphi 0, %s69
    %s87 = sphi 0, %s87
    %s89 = sphi 0, %s87
    %s90 = sphi 0, %s89
    %s104 = sphi 0, %s90
    %s108 = sphi 0, %s108
    %s110 = sphi 0, %s108
    %s111 = sphi 0, %s110
    %s125 = sphi 0, %s111
    %s131 = sphi 0, %s133
    %s134 = sphi 0, %s131
    %s135 = sphi 0, %s134
    %s151 = sphi 0, %s135
  $region4: #{tpu_custom_call.1} parent=0 // loop_header_branch
    %14 = sbr.rel (%p12) target = $region8
  $region5: #{tpu_custom_call.1} parent=0 // loop_body
    %s16 = ssub.s32 %s11, 1
    %s17 = ssub.s32 %s11, 2
    %s18 = sadd.s32 %s11, 1
    %s19 = ssub.s32 %s11, %s18
    %p20 = scmp.eq.s32.totalorder %s19, 0
    %s22 = sadd.s32 %s21, 1
    %s23 = scalar_select %p20, %s21, %s22
    %p26 = pneg %p20
    %p27 = scmp.eq.s32.totalorder %s11, 3
    %p28 = por %p26, %p27
    %p29 = scmp.ne.s32.totalorder %s21, %s24
    %p30 = scmp.eq.s32.totalorder %s11, 0
    %p31 = por %p29, %p30
    %p32 = scmp.ne.s32.totalorder %s21, %s24
    %p33 = scmp.eq.s32.totalorder %s16, 3
    %p34 = por %p32, %p33
    %p35 = scmp.ne.s32.totalorder %s24, %s25
    %p36 = scmp.eq.s32.totalorder %s16, 0
    %p37 = por %p35, %p36
    %p38 = scmp.ne.s32.totalorder %s24, %s25
    %p39 = scmp.eq.s32.totalorder %s17, 3
    %p40 = por %p38, %p39
    %p42 = scmp.ne.s32.totalorder %s25, %s41
    %p43 = scmp.eq.s32.totalorder %s17, 0
    %p44 = por %p42, %p43
    %s46 = sadd.s32 %s45, 1
    %p49 = scmp.eq.s32.totalorder %s11, 3
    %p50 = scmp.ne.s32.totalorder %s45, %s47
    %p51 = scmp.eq.s32.totalorder %s11, 0
    %p52 = por %p50, %p51
    %p53 = scmp.ne.s32.totalorder %s45, %s47
    %p54 = scmp.eq.s32.totalorder %s16, 3
    %p55 = por %p53, %p54
    %p56 = scmp.ne.s32.totalorder %s47, %s48
    %p57 = scmp.eq.s32.totalorder %s16, 0
    %p58 = por %p56, %p57
    %p59 = scmp.ne.s32.totalorder %s47, %s48
    %p60 = scmp.eq.s32.totalorder %s17, 3
    %p61 = por %p59, %p60
    %p63 = scmp.ne.s32.totalorder %s48, %s62
    %p64 = scmp.eq.s32.totalorder %s17, 0
    %p65 = por %p63, %p64
    %s67 = sadd.s32 %s66, 1
    %p70 = scmp.eq.s32.totalorder %s11, 3
    %p71 = scmp.ne.s32.totalorder %s66, %s68
    %p72 = scmp.eq.s32.totalorder %s11, 0
    %p73 = por %p71, %p72
    %p74 = scmp.ne.s32.totalorder %s66, %s68
    %p75 = scmp.eq.s32.totalorder %s16, 3
    %p76 = por %p74, %p75
    %p77 = scmp.ne.s32.totalorder %s68, %s69
    %p78 = scmp.eq.s32.totalorder %s16, 0
    %p79 = por %p77, %p78
    %p80 = scmp.ne.s32.totalorder %s68, %s69
    %p81 = scmp.eq.s32.totalorder %s17, 3
    %p82 = por %p80, %p81
    %p84 = scmp.ne.s32.totalorder %s69, %s83
    %p85 = scmp.eq.s32.totalorder %s17, 0
    %p86 = por %p84, %p85
    %s88 = sadd.s32 %s87, 1
    %p91 = scmp.eq.s32.totalorder %s11, 3
    %p92 = scmp.ne.s32.totalorder %s87, %s89
    %p93 = scmp.eq.s32.totalorder %s11, 0
    %p94 = por %p92, %p93
    %p95 = scmp.ne.s32.totalorder %s87, %s89
    %p96 = scmp.eq.s32.totalorder %s16, 3
    %p97 = por %p95, %p96
    %p98 = scmp.ne.s32.totalorder %s89, %s90
    %p99 = scmp.eq.s32.totalorder %s16, 0
    %p100 = por %p98, %p99
    %p101 = scmp.ne.s32.totalorder %s89, %s90
    %p102 = scmp.eq.s32.totalorder %s17, 3
    %p103 = por %p101, %p102
    %p105 = scmp.ne.s32.totalorder %s90, %s104
    %p106 = scmp.eq.s32.totalorder %s17, 0
    %p107 = por %p105, %p106
    %s109 = sadd.s32 %s108, 1
    %p112 = scmp.eq.s32.totalorder %s11, 3
    %p113 = scmp.ne.s32.totalorder %s108, %s110
    %p114 = scmp.eq.s32.totalorder %s11, 0
    %p115 = por %p113, %p114
    %p116 = scmp.ne.s32.totalorder %s108, %s110
    %p117 = scmp.eq.s32.totalorder %s16, 3
    %p118 = por %p116, %p117
    %p119 = scmp.ne.s32.totalorder %s110, %s111
    %p120 = scmp.eq.s32.totalorder %s16, 0
    %p121 = por %p119, %p120
    %p122 = scmp.ne.s32.totalorder %s110, %s111
    %p123 = scmp.eq.s32.totalorder %s17, 3
    %p124 = por %p122, %p123
    %p126 = scmp.ne.s32.totalorder %s111, %s125
    %p127 = scmp.eq.s32.totalorder %s17, 0
    %p128 = por %p126, %p127
    %s129 = ssub.s32 %s11, %s18
    %p130 = scmp.eq.s32.totalorder %s129, 0
    %s132 = sadd.s32 %s131, 1
    %s133 = scalar_select %p130, %s131, %s132
    %p136 = pneg %p130
    %p137 = scmp.eq.s32.totalorder %s11, 3
    %p138 = por %p136, %p137
    %p139 = scmp.ne.s32.totalorder %s131, %s134
    %p140 = scmp.eq.s32.totalorder %s11, 0
    %p141 = por %p139, %p140
    %p142 = scmp.ne.s32.totalorder %s131, %s134
    %p143 = scmp.eq.s32.totalorder %s16, 3
    %p144 = por %p142, %p143
    %p145 = scmp.ne.s32.totalorder %s134, %s135
    %p146 = scmp.eq.s32.totalorder %s16, 0
    %p147 = por %p145, %p146
    %p148 = scmp.ne.s32.totalorder %s134, %s135
    %p149 = scmp.eq.s32.totalorder %s17, 3
    %p150 = por %p148, %p149
    %p152 = scmp.ne.s32.totalorder %s135, %s151
    %p153 = scmp.eq.s32.totalorder %s17, 0
    %p154 = por %p152, %p153
    %p155 = scmp.le.s32.totalorder 1, %s11
    %p156 = scmp.lt.s32.totalorder %s11, 5
    %p157 = pnand %p155, %p156
    %p158 = pneg %p157
    // Predicated region
    $region9: #{tpu_custom_call.1} parent=5 // pred_check
      _
    $region10: #{tpu_custom_call.1} parent=5 // pred_check_branch
      %160 = sbr.rel (%p157) target = $region12
    $region11: #{tpu_custom_call.1} parent=5 // pred_region
      %s161 = ssub.s32 %s11, 1
      // Predicated region
      $region13: #{tpu_custom_call.1} parent=11 // pred_check
        %p162 = pneg %p58
      $region14: #{tpu_custom_call.1} parent=11 // pred_check_branch
        %164 = sbr.rel (%p162) target = $region16
      $region15: #{tpu_custom_call.1} parent=11 // pred_region
        _
      $region16: #{tpu_custom_call.1} parent=11 // pred_fallthru
        _
      // Predicated region
      $region17: #{tpu_custom_call.1} parent=11 // pred_check
        %p165 = pneg %p79
      $region18: #{tpu_custom_call.1} parent=11 // pred_check_branch
        %167 = sbr.rel (%p165) target = $region20
      $region19: #{tpu_custom_call.1} parent=11 // pred_region
        _
      $region20: #{tpu_custom_call.1} parent=11 // pred_fallthru
        _
      // Predicated region
      $region21: #{tpu_custom_call.1} parent=11 // pred_check
        %p168 = pneg %p100
      $region22: #{tpu_custom_call.1} parent=11 // pred_check_branch
        %170 = sbr.rel (%p168) target = $region24
      $region23: #{tpu_custom_call.1} parent=11 // pred_region
        _
      $region24: #{tpu_custom_call.1} parent=11 // pred_fallthru
        _
      // Predicated region
      $region25: #{tpu_custom_call.1} parent=11 // pred_check
        %p171 = pneg %p121
      $region26: #{tpu_custom_call.1} parent=11 // pred_check_branch
        %173 = sbr.rel (%p171) target = $region28
      $region27: #{tpu_custom_call.1} parent=11 // pred_region
        _
      $region28: #{tpu_custom_call.1} parent=11 // pred_fallthru
        _
    $region12: #{tpu_custom_call.1} parent=5 // pred_fallthru
      _
    %p174 = scmp.lt.s32.totalorder %s11, 4
    // Predicated region
    $region29: #{tpu_custom_call.1} parent=5 // pred_check
      %p175 = pneg %p174
    $region30: #{tpu_custom_call.1} parent=5 // pred_check_branch
      %177 = sbr.rel (%p175) target = $region32
    $region31: #{tpu_custom_call.1} parent=5 // pred_region
      // Predicated region
      $region33: #{tpu_custom_call.1} parent=31 // pred_check
        %p178 = pneg %p31
      $region34: #{tpu_custom_call.1} parent=31 // pred_check_branch
        %180 = sbr.rel (%p178) target = $region36
      $region35: #{tpu_custom_call.1} parent=31 // pred_region
        %s181 = smul.u32 32, %s11
        %p182 = scmp.lt.s32.totalorder %s181, 127
        %s183 = scalar_select %p182, %s181, 127
        %s184 = smul.addr %s183, 8
        %s185 = scalar_lea.vmem %s0, %s184
        %s186 = smul.u32 32, %s11
      $region36: #{tpu_custom_call.1} parent=31 // pred_fallthru
        _
    $region32: #{tpu_custom_call.1} parent=5 // pred_fallthru
      _
    %p187 = scmp.le.s32.totalorder 1, %s11
    %p188 = scmp.lt.s32.totalorder %s11, 5
    %p189 = pnand %p187, %p188
    %p190 = pneg %p189
    // Predicated region
    $region37: #{tpu_custom_call.1} parent=5 // pred_check
      _
    $region38: #{tpu_custom_call.1} parent=5 // pred_check_branch
      %192 = sbr.rel (%p189) target = $region40
    $region39: #{tpu_custom_call.1} parent=5 // pred_region
      %s193 = ssub.s32 %s11, 1
      %s194 = smul.u32 32, %s16
      %p195 = scmp.lt.s32.totalorder %s194, 127
      %s196 = scalar_select %p195, %s194, 127
      %s197 = smul.addr %s196, 8
      %s198 = scalar_lea.vmem %s0, %s197
      %p199 = pneg %p37
      %p200 = pneg %p34
      %p201 = pneg %p58
      %p202 = pneg %p55
      %p203 = pneg %p79
      %p204 = pneg %p76
      %p205 = pneg %p100
      %p206 = pneg %p97
      %p207 = pneg %p121
      %p208 = pneg %p118
      %p209 = pneg %p147
      %p210 = pneg %p144
      %s211 = smul.u32 32, %s16
      %p212 = scmp.lt.s32.totalorder %s211, 127
      %s213 = scalar_select %p212, %s211, 127
      %s214 = smul.addr %s213, 8
      %s215 = scalar_lea.vmem %s5, %s214
      %s216 = smul.u32 32, %s16
      %p217 = scmp.lt.s32.totalorder %s216, 127
      %s218 = scalar_select %p217, %s216, 127
      %s219 = smul.addr %s218, 8
      %s220 = scalar_lea.vmem %s0, %s219
      %s221 = smul.u32 32, %s16
      %s222 = smul.u32 32, %s16
      %p223 = scmp.lt.s32.totalorder %s222, 127
      %s224 = scalar_select %p223, %s222, 127
      %s225 = smul.addr %s224, 8
      %s226 = scalar_lea.vmem %s5, %s225
      %s227 = smul.u32 32, %s16
      %v228 = vld [vmem:[%s220] sm:$0xff]
      %v229 = vld [vmem:[%s220 + $0x8] sm:$0xff]
      %v230 = vld [vmem:[%s220 + $0x10] sm:$0xff]
      %v231 = vld [vmem:[%s220 + $0x18] sm:$0xff]
      %v232 = vld [vmem:[%s220 + $0x20] sm:$0xff]
      %v233 = vld [vmem:[%s220 + $0x28] sm:$0xff]
      %v234 = vld [vmem:[%s220 + $0x30] sm:$0xff]
      %v235 = vld [vmem:[%s220 + $0x38] sm:$0xff]
      %v236 = vld [vmem:[%s220 + $0x40] sm:$0xff]
      %v237 = vld [vmem:[%s220 + $0x48] sm:$0xff]
      %v238 = vld [vmem:[%s220 + $0x50] sm:$0xff]
      %v239 = vld [vmem:[%s220 + $0x58] sm:$0xff]
      %v240 = vld [vmem:[%s220 + $0x60] sm:$0xff]
      %v241 = vld [vmem:[%s220 + $0x68] sm:$0xff]
      %v242 = vld [vmem:[%s220 + $0x70] sm:$0xff]
      %v243 = vld [vmem:[%s220 + $0x78] sm:$0xff]
      %v244 = vld [vmem:[%s220 + $0x80] sm:$0xff]
      %v245 = vld [vmem:[%s220 + $0x88] sm:$0xff]
      %v246 = vld [vmem:[%s220 + $0x90] sm:$0xff]
      %v247 = vld [vmem:[%s220 + $0x98] sm:$0xff]
      %v248 = vld [vmem:[%s220 + $0xa0] sm:$0xff]
      %v249 = vld [vmem:[%s220 + $0xa8] sm:$0xff]
      %v250 = vld [vmem:[%s220 + $0xb0] sm:$0xff]
      %v251 = vld [vmem:[%s220 + $0xb8] sm:$0xff]
      %v252 = vld [vmem:[%s220 + $0xc0] sm:$0xff]
      %v253 = vld [vmem:[%s220 + $0xc8] sm:$0xff]
      %v254 = vld [vmem:[%s220 + $0xd0] sm:$0xff]
      %v255 = vld [vmem:[%s220 + $0xd8] sm:$0xff]
      %v256 = vld [vmem:[%s220 + $0xe0] sm:$0xff]
      %v257 = vld [vmem:[%s220 + $0xe8] sm:$0xff]
      %v258 = vld [vmem:[%s220 + $0xf0] sm:$0xff]
      %v259 = vld [vmem:[%s220 + $0xf8] sm:$0xff]
      %v260 = vld [vmem:[%s1] sm:$0xf]
      %v261 = vld [vmem:[%s2] sm:$0x1]
      %v263 = vlaneseq
      %v264 = vshrl.u32 %v263, 7
      %v265 = vsub.s32 0, %v264
      %v266 = vrot.slane %v261, %v265
      %vm268 = vcmask 31744
      %v270 = vsel %vm268, %v228, 0
      %v273 = vsel %vm268, %v229, 0
      %v276 = vsel %vm268, %v230, 0
      %v279 = vsel %vm268, %v231, 0
      %v282 = vsel %vm268, %v232, 0
      %v285 = vsel %vm268, %v233, 0
      %v288 = vsel %vm268, %v234, 0
      %v291 = vsel %vm268, %v235, 0
      %v294 = vsel %vm268, %v236, 0
      %v297 = vsel %vm268, %v237, 0
      %v300 = vsel %vm268, %v238, 0
      %v303 = vsel %vm268, %v239, 0
      %v306 = vsel %vm268, %v240, 0
      %v309 = vsel %vm268, %v241, 0
      %v312 = vsel %vm268, %v242, 0
      %v315 = vsel %vm268, %v243, 0
      %v318 = vsel %vm268, %v244, 0
      %v321 = vsel %vm268, %v245, 0
      %v324 = vsel %vm268, %v246, 0
      %v327 = vsel %vm268, %v247, 0
      %v330 = vsel %vm268, %v248, 0
      %v333 = vsel %vm268, %v249, 0
      %v336 = vsel %vm268, %v250, 0
      %v339 = vsel %vm268, %v251, 0
      %v342 = vsel %vm268, %v252, 0
      %v345 = vsel %vm268, %v253, 0
      %v348 = vsel %vm268, %v254, 0
      %v351 = vsel %vm268, %v255, 0
      %v354 = vsel %vm268, %v256, 0
      %v357 = vsel %vm268, %v257, 0
      %v360 = vsel %vm268, %v258, 0
      %v363 = vsel %vm268, %v259, 0
      %vm365 = vcmask 1043456
      %v367 = vsel %vm365, %v260, 0
      %369 = vmatprep.subr.mxu0 0.0
      %370 = vmatpush1.msra.mxu0 0.0
      %371 = vmatprep.subr.mxu0 0.0
      %372 = vmatpush1.msra.mxu0 0.0
      %373 = vmatprep.subr.mxu0 0.0
      %374 = vmatpush1.msra.mxu0 0.0
      %375 = vmatprep.subr.mxu0 0.0
      %376 = vmatpush1.msra.mxu0 0.0
      %377 = vmatprep.subr.mxu0 0.0
      %378 = vmatpush1.msra.mxu0 0.0
      %379 = vmatprep.subr.mxu0 0.0
      %380 = vmatpush1.msra.mxu0 0.0
      %381 = vmatprep.subr.mxu0 0.0
      %382 = vmatpush1.msra.mxu0 0.0
      %383 = vmatprep.subr.mxu0 0.0
      %384 = vmatpush1.msra.mxu0 0.0
      %385 = vmatprep.subr.mxu0 0.0
      %386 = vmatpush1.msra.mxu0 0.0
      %387 = vmatprep.subr.mxu0 0.0
      %388 = vmatpush1.msra.mxu0 0.0
      %389 = vmatprep.subr.mxu0 0.0
      %390 = vmatpush1.msra.mxu0 0.0
      %391 = vmatprep.subr.mxu0 0.0
      %392 = vmatpush1.msra.mxu0 0.0
      %393 = vmatprep.subr.mxu0 0.0
      %394 = vmatpush1.msra.mxu0 0.0
      %395 = vmatprep.subr.mxu0 0.0
      %396 = vmatpush1.msra.mxu0 0.0
      %397 = vmatprep.subr.mxu0 0.0
      %398 = vmatpush1.msra.mxu0 0.0
      %399 = vmatprep.subr.mxu0 0.0
      %400 = vmatpush1.msra.mxu0 %v367
      %401 = vmatprep.subr.mxu0 0.0
      %402 = vmatpush2.msra.mxu0 0.0
      %403 = vmatprep.subr.mxu0 0.0
      %404 = vmatpush2.msra.mxu0 0.0
      %405 = vmatprep.subr.mxu0 0.0
      %406 = vmatpush2.msra.mxu0 0.0
      %407 = vmatprep.subr.mxu0 0.0
      %408 = vmatpush2.msra.mxu0 0.0
      %409 = vmatprep.subr.mxu0 0.0
      %410 = vmatpush2.msra.mxu0 0.0
      %411 = vmatprep.subr.mxu0 0.0
      %412 = vmatpush2.msra.mxu0 0.0
      %413 = vmatprep.subr.mxu0 0.0
      %414 = vmatpush2.msra.mxu0 0.0
      %415 = vmatprep.subr.mxu0 0.0
      %416 = vmatpush2.msra.mxu0 0.0
      %417 = vmatprep.subr.mxu0 0.0
      %418 = vmatpush2.msra.mxu0 0.0
      %419 = vmatprep.subr.mxu0 0.0
      %420 = vmatpush2.msra.mxu0 0.0
      %421 = vmatprep.subr.mxu0 0.0
      %422 = vmatpush2.msra.mxu0 0.0
      %423 = vmatprep.subr.mxu0 0.0
      %424 = vmatpush2.msra.mxu0 0.0
      %425 = vmatprep.subr.mxu0 0.0
      %426 = vmatpush2.msra.mxu0 0.0
      %427 = vmatprep.subr.mxu0 0.0
      %428 = vmatpush2.msra.mxu0 0.0
      %429 = vmatprep.subr.mxu0 0.0
      %430 = vmatpush2.msra.mxu0 0.0
      %431 = vmatprep.subr.mxu0 0.0
      %432 = vmatpush2.msra.mxu0 0.0
      %433 = vmatprep.mubr.f32.mxu0 0.0
      %434 = vmatmul.mubr.f32.gmra.mxu0 %v270
      %v435 = vpop.f32.mrf.mxu0
      %v436 = vadd.f32 %v266, %v435
      %v437 = vpop.f32.mrf.mxu0
      %438 = vmatprep.mubr.f32.mxu0 0.0
      %439 = vmatmul.mubr.f32.gmra.mxu0 %v273
      %v440 = vpop.f32.mrf.mxu0
      %v441 = vadd.f32 %v266, %v440
      %v442 = vpop.f32.mrf.mxu0
      %443 = vmatprep.mubr.f32.mxu0 0.0
      %444 = vmatmul.mubr.f32.gmra.mxu0 %v276
      %v445 = vpop.f32.mrf.mxu0
      %v446 = vadd.f32 %v266, %v445
      %v447 = vpop.f32.mrf.mxu0
      %448 = vmatprep.mubr.f32.mxu0 0.0
      %449 = vmatmul.mubr.f32.gmra.mxu0 %v279
      %v450 = vpop.f32.mrf.mxu0
      %v451 = vadd.f32 %v266, %v450
      %v452 = vpop.f32.mrf.mxu0
      %453 = vmatprep.mubr.f32.mxu0 0.0
      %454 = vmatmul.mubr.f32.gmra.mxu0 %v282
      %v455 = vpop.f32.mrf.mxu0
      %v456 = vadd.f32 %v266, %v455
      %v457 = vpop.f32.mrf.mxu0
      %458 = vmatprep.mubr.f32.mxu0 0.0
      %459 = vmatmul.mubr.f32.gmra.mxu0 %v285
      %v460 = vpop.f32.mrf.mxu0
      %v461 = vadd.f32 %v266, %v460
      %v462 = vpop.f32.mrf.mxu0
      %463 = vmatprep.mubr.f32.mxu0 0.0
      %464 = vmatmul.mubr.f32.gmra.mxu0 %v288
      %v465 = vpop.f32.mrf.mxu0
      %v466 = vadd.f32 %v266, %v465
      %v467 = vpop.f32.mrf.mxu0
      %468 = vmatprep.mubr.f32.mxu0 0.0
      %469 = vmatmul.mubr.f32.gmra.mxu0 %v291
      %v470 = vpop.f32.mrf.mxu0
      %v471 = vadd.f32 %v266, %v470
      %v472 = vpop.f32.mrf.mxu0
      %473 = vmatprep.mubr.f32.mxu0 0.0
      %474 = vmatmul.mubr.f32.gmra.mxu0 %v294
      %v475 = vpop.f32.mrf.mxu0
      %v476 = vadd.f32 %v266, %v475
      %v477 = vpop.f32.mrf.mxu0
      %478 = vmatprep.mubr.f32.mxu0 0.0
      %479 = vmatmul.mubr.f32.gmra.mxu0 %v297
      %v480 = vpop.f32.mrf.mxu0
      %v481 = vadd.f32 %v266, %v480
      %v482 = vpop.f32.mrf.mxu0
      %483 = vmatprep.mubr.f32.mxu0 0.0
      %484 = vmatmul.mubr.f32.gmra.mxu0 %v300
      %v485 = vpop.f32.mrf.mxu0
      %v486 = vadd.f32 %v266, %v485
      %v487 = vpop.f32.mrf.mxu0
      %488 = vmatprep.mubr.f32.mxu0 0.0
      %489 = vmatmul.mubr.f32.gmra.mxu0 %v303
      %v490 = vpop.f32.mrf.mxu0
      %v491 = vadd.f32 %v266, %v490
      %v492 = vpop.f32.mrf.mxu0
      %493 = vmatprep.mubr.f32.mxu0 0.0
      %494 = vmatmul.mubr.f32.gmra.mxu0 %v306
      %v495 = vpop.f32.mrf.mxu0
      %v496 = vadd.f32 %v266, %v495
      %v497 = vpop.f32.mrf.mxu0
      %498 = vmatprep.mubr.f32.mxu0 0.0
      %499 = vmatmul.mubr.f32.gmra.mxu0 %v309
      %v500 = vpop.f32.mrf.mxu0
      %v501 = vadd.f32 %v266, %v500
      %v502 = vpop.f32.mrf.mxu0
      %503 = vmatprep.mubr.f32.mxu0 0.0
      %504 = vmatmul.mubr.f32.gmra.mxu0 %v312
      %v505 = vpop.f32.mrf.mxu0
      %v506 = vadd.f32 %v266, %v505
      %v507 = vpop.f32.mrf.mxu0
      %508 = vmatprep.mubr.f32.mxu0 0.0
      %509 = vmatmul.mubr.f32.gmra.mxu0 %v315
      %v510 = vpop.f32.mrf.mxu0
      %v511 = vadd.f32 %v266, %v510
      %v512 = vpop.f32.mrf.mxu0
      %513 = vmatprep.mubr.f32.mxu0 0.0
      %514 = vmatmul.mubr.f32.gmra.mxu0 %v318
      %v515 = vpop.f32.mrf.mxu0
      %v516 = vadd.f32 %v266, %v515
      %v517 = vpop.f32.mrf.mxu0
      %518 = vmatprep.mubr.f32.mxu0 0.0
      %519 = vmatmul.mubr.f32.gmra.mxu0 %v321
      %v520 = vpop.f32.mrf.mxu0
      %v521 = vadd.f32 %v266, %v520
      %v522 = vpop.f32.mrf.mxu0
      %523 = vmatprep.mubr.f32.mxu0 0.0
      %524 = vmatmul.mubr.f32.gmra.mxu0 %v324
      %v525 = vpop.f32.mrf.mxu0
      %v526 = vadd.f32 %v266, %v525
      %v527 = vpop.f32.mrf.mxu0
      %528 = vmatprep.mubr.f32.mxu0 0.0
      %529 = vmatmul.mubr.f32.gmra.mxu0 %v327
      %v530 = vpop.f32.mrf.mxu0
      %v531 = vadd.f32 %v266, %v530
      %v532 = vpop.f32.mrf.mxu0
      %533 = vmatprep.mubr.f32.mxu0 0.0
      %534 = vmatmul.mubr.f32.gmra.mxu0 %v330
      %v535 = vpop.f32.mrf.mxu0
      %v536 = vadd.f32 %v266, %v535
      %v537 = vpop.f32.mrf.mxu0
      %538 = vmatprep.mubr.f32.mxu0 0.0
      %539 = vmatmul.mubr.f32.gmra.mxu0 %v333
      %v540 = vpop.f32.mrf.mxu0
      %v541 = vadd.f32 %v266, %v540
      %v542 = vpop.f32.mrf.mxu0
      %543 = vmatprep.mubr.f32.mxu0 0.0
      %544 = vmatmul.mubr.f32.gmra.mxu0 %v336
      %v545 = vpop.f32.mrf.mxu0
      %v546 = vadd.f32 %v266, %v545
      %v547 = vpop.f32.mrf.mxu0
      %548 = vmatprep.mubr.f32.mxu0 0.0
      %549 = vmatmul.mubr.f32.gmra.mxu0 %v339
      %v550 = vpop.f32.mrf.mxu0
      %v551 = vadd.f32 %v266, %v550
      %v552 = vpop.f32.mrf.mxu0
      %553 = vmatprep.mubr.f32.mxu0 0.0
      %554 = vmatmul.mubr.f32.gmra.mxu0 %v342
      %v555 = vpop.f32.mrf.mxu0
      %v556 = vadd.f32 %v266, %v555
      %v557 = vpop.f32.mrf.mxu0
      %558 = vmatprep.mubr.f32.mxu0 0.0
      %559 = vmatmul.mubr.f32.gmra.mxu0 %v345
      %v560 = vpop.f32.mrf.mxu0
      %v561 = vadd.f32 %v266, %v560
      %v562 = vpop.f32.mrf.mxu0
      %563 = vmatprep.mubr.f32.mxu0 0.0
      %564 = vmatmul.mubr.f32.gmra.mxu0 %v348
      %v565 = vpop.f32.mrf.mxu0
      %v566 = vadd.f32 %v266, %v565
      %v567 = vpop.f32.mrf.mxu0
      %568 = vmatprep.mubr.f32.mxu0 0.0
      %569 = vmatmul.mubr.f32.gmra.mxu0 %v351
      %v570 = vpop.f32.mrf.mxu0
      %v571 = vadd.f32 %v266, %v570
      %v572 = vpop.f32.mrf.mxu0
      %573 = vmatprep.mubr.f32.mxu0 0.0
      %574 = vmatmul.mubr.f32.gmra.mxu0 %v354
      %v575 = vpop.f32.mrf.mxu0
      %v576 = vadd.f32 %v266, %v575
      %v577 = vpop.f32.mrf.mxu0
      %578 = vmatprep.mubr.f32.mxu0 0.0
      %579 = vmatmul.mubr.f32.gmra.mxu0 %v357
      %v580 = vpop.f32.mrf.mxu0
      %v581 = vadd.f32 %v266, %v580
      %v582 = vpop.f32.mrf.mxu0
      %583 = vmatprep.mubr.f32.mxu0 0.0
      %584 = vmatmul.mubr.f32.gmra.mxu0 %v360
      %v585 = vpop.f32.mrf.mxu0
      %v586 = vadd.f32 %v266, %v585
      %v587 = vpop.f32.mrf.mxu0
      %588 = vmatprep.mubr.f32.mxu0 0.0
      %589 = vmatmul.mubr.f32.gmra.mxu0 %v363
      %v590 = vpop.f32.mrf.mxu0
      %v591 = vadd.f32 %v266, %v590
      %v592 = vpop.f32.mrf.mxu0
      %593 = vdwg.mxu0
      %v594 = vmin.f32 %v436, 20.0
      %v595 = vmin.f32 %v441, 20.0
      %v596 = vmin.f32 %v446, 20.0
      %v597 = vmin.f32 %v451, 20.0
      %v598 = vmin.f32 %v456, 20.0
      %v599 = vmin.f32 %v461, 20.0
      %v600 = vmin.f32 %v466, 20.0
      %v601 = vmin.f32 %v471, 20.0
      %v602 = vmin.f32 %v476, 20.0
      %v603 = vmin.f32 %v481, 20.0
      %v604 = vmin.f32 %v486, 20.0
      %v605 = vmin.f32 %v491, 20.0
      %v606 = vmin.f32 %v496, 20.0
      %v607 = vmin.f32 %v501, 20.0
      %v608 = vmin.f32 %v506, 20.0
      %v609 = vmin.f32 %v511, 20.0
      %v610 = vmin.f32 %v516, 20.0
      %v611 = vmin.f32 %v521, 20.0
      %v612 = vmin.f32 %v526, 20.0
      %v613 = vmin.f32 %v531, 20.0
      %v614 = vmin.f32 %v536, 20.0
      %v615 = vmin.f32 %v541, 20.0
      %v616 = vmin.f32 %v546, 20.0
      %v617 = vmin.f32 %v551, 20.0
      %v618 = vmin.f32 %v556, 20.0
      %v619 = vmin.f32 %v561, 20.0
      %v620 = vmin.f32 %v566, 20.0
      %v621 = vmin.f32 %v571, 20.0
      %v622 = vmin.f32 %v576, 20.0
      %v623 = vmin.f32 %v581, 20.0
      %v624 = vmin.f32 %v586, 20.0
      %v625 = vmin.f32 %v591, 20.0
      %v626 = vmul.f32 %v594, 1.442695
      %v627 = vpow.pop %v626
      %v628 = vmul.f32 %v595, 1.442695
      %v629 = vpow.pop %v628
      %v630 = vmul.f32 %v596, 1.442695
      %v631 = vpow.pop %v630
      %v632 = vmul.f32 %v597, 1.442695
      %v633 = vpow.pop %v632
      %v634 = vmul.f32 %v598, 1.442695
      %v635 = vpow.pop %v634
      %v636 = vmul.f32 %v599, 1.442695
      %v637 = vpow.pop %v636
      %v638 = vmul.f32 %v600, 1.442695
      %v639 = vpow.pop %v638
      %v640 = vmul.f32 %v601, 1.442695
      %v641 = vpow.pop %v640
      %v642 = vmul.f32 %v602, 1.442695
      %v643 = vpow.pop %v642
      %v644 = vmul.f32 %v603, 1.442695
      %v645 = vpow.pop %v644
      %v646 = vmul.f32 %v604, 1.442695
      %v647 = vpow.pop %v646
      %v648 = vmul.f32 %v605, 1.442695
      %v649 = vpow.pop %v648
      %v650 = vmul.f32 %v606, 1.442695
      %v651 = vpow.pop %v650
      %v652 = vmul.f32 %v607, 1.442695
      %v653 = vpow.pop %v652
      %v654 = vmul.f32 %v608, 1.442695
      %v655 = vpow.pop %v654
      %v656 = vmul.f32 %v609, 1.442695
      %v657 = vpow.pop %v656
      %v658 = vmul.f32 %v610, 1.442695
      %v659 = vpow.pop %v658
      %v660 = vmul.f32 %v611, 1.442695
      %v661 = vpow.pop %v660
      %v662 = vmul.f32 %v612, 1.442695
      %v663 = vpow.pop %v662
      %v664 = vmul.f32 %v613, 1.442695
      %v665 = vpow.pop %v664
      %v666 = vmul.f32 %v614, 1.442695
      %v667 = vpow.pop %v666
      %v668 = vmul.f32 %v615, 1.442695
      %v669 = vpow.pop %v668
      %v670 = vmul.f32 %v616, 1.442695
      %v671 = vpow.pop %v670
      %v672 = vmul.f32 %v617, 1.442695
      %v673 = vpow.pop %v672
      %v674 = vmul.f32 %v618, 1.442695
      %v675 = vpow.pop %v674
      %v676 = vmul.f32 %v619, 1.442695
      %v677 = vpow.pop %v676
      %v678 = vmul.f32 %v620, 1.442695
      %v679 = vpow.pop %v678
      %v680 = vmul.f32 %v621, 1.442695
      %v681 = vpow.pop %v680
      %v682 = vmul.f32 %v622, 1.442695
      %v683 = vpow.pop %v682
      %v684 = vmul.f32 %v623, 1.442695
      %v685 = vpow.pop %v684
      %v686 = vmul.f32 %v624, 1.442695
      %v687 = vpow.pop %v686
      %v688 = vmul.f32 %v625, 1.442695
      %v689 = vpow.pop %v688
      %v690 = vadd.f32 %v627, 2.0
      %v691 = vadd.f32 %v629, 2.0
      %v692 = vadd.f32 %v631, 2.0
      %v693 = vadd.f32 %v633, 2.0
      %v694 = vadd.f32 %v635, 2.0
      %v695 = vadd.f32 %v637, 2.0
      %v696 = vadd.f32 %v639, 2.0
      %v697 = vadd.f32 %v641, 2.0
      %v698 = vadd.f32 %v643, 2.0
      %v699 = vadd.f32 %v645, 2.0
      %v700 = vadd.f32 %v647, 2.0
      %v701 = vadd.f32 %v649, 2.0
      %v702 = vadd.f32 %v651, 2.0
      %v703 = vadd.f32 %v653, 2.0
      %v704 = vadd.f32 %v655, 2.0
      %v705 = vadd.f32 %v657, 2.0
      %v706 = vadd.f32 %v659, 2.0
      %v707 = vadd.f32 %v661, 2.0
      %v708 = vadd.f32 %v663, 2.0
      %v709 = vadd.f32 %v665, 2.0
      %v710 = vadd.f32 %v667, 2.0
      %v711 = vadd.f32 %v669, 2.0
      %v712 = vadd.f32 %v671, 2.0
      %v713 = vadd.f32 %v673, 2.0
      %v714 = vadd.f32 %v675, 2.0
      %v715 = vadd.f32 %v677, 2.0
      %v716 = vadd.f32 %v679, 2.0
      %v717 = vadd.f32 %v681, 2.0
      %v718 = vadd.f32 %v683, 2.0
      %v719 = vadd.f32 %v685, 2.0
      %v720 = vadd.f32 %v687, 2.0
      %v721 = vadd.f32 %v689, 2.0
      %v722 = vmul.f32 %v627, %v690
      %v723 = vmul.f32 %v629, %v691
      %v724 = vmul.f32 %v631, %v692
      %v725 = vmul.f32 %v633, %v693
      %v726 = vmul.f32 %v635, %v694
      %v727 = vmul.f32 %v637, %v695
      %v728 = vmul.f32 %v639, %v696
      %v729 = vmul.f32 %v641, %v697
      %v730 = vmul.f32 %v643, %v698
      %v731 = vmul.f32 %v645, %v699
      %v732 = vmul.f32 %v647, %v700
      %v733 = vmul.f32 %v649, %v701
      %v734 = vmul.f32 %v651, %v702
      %v735 = vmul.f32 %v653, %v703
      %v736 = vmul.f32 %v655, %v704
      %v737 = vmul.f32 %v657, %v705
      %v738 = vmul.f32 %v659, %v706
      %v739 = vmul.f32 %v661, %v707
      %v740 = vmul.f32 %v663, %v708
      %v741 = vmul.f32 %v665, %v709
      %v742 = vmul.f32 %v667, %v710
      %v743 = vmul.f32 %v669, %v711
      %v744 = vmul.f32 %v671, %v712
      %v745 = vmul.f32 %v673, %v713
      %v746 = vmul.f32 %v675, %v714
      %v747 = vmul.f32 %v677, %v715
      %v748 = vmul.f32 %v679, %v716
      %v749 = vmul.f32 %v681, %v717
      %v750 = vmul.f32 %v683, %v718
      %v751 = vmul.f32 %v685, %v719
      %v752 = vmul.f32 %v687, %v720
      %v753 = vmul.f32 %v689, %v721
      %v754 = vadd.f32 %v722, 2.0
      %v755 = vadd.f32 %v723, 2.0
      %v756 = vadd.f32 %v724, 2.0
      %v757 = vadd.f32 %v725, 2.0
      %v758 = vadd.f32 %v726, 2.0
      %v759 = vadd.f32 %v727, 2.0
      %v760 = vadd.f32 %v728, 2.0
      %v761 = vadd.f32 %v729, 2.0
      %v762 = vadd.f32 %v730, 2.0
      %v763 = vadd.f32 %v731, 2.0
      %v764 = vadd.f32 %v732, 2.0
      %v765 = vadd.f32 %v733, 2.0
      %v766 = vadd.f32 %v734, 2.0
      %v767 = vadd.f32 %v735, 2.0
      %v768 = vadd.f32 %v736, 2.0
      %v769 = vadd.f32 %v737, 2.0
      %v770 = vadd.f32 %v738, 2.0
      %v771 = vadd.f32 %v739, 2.0
      %v772 = vadd.f32 %v740, 2.0
      %v773 = vadd.f32 %v741, 2.0
      %v774 = vadd.f32 %v742, 2.0
      %v775 = vadd.f32 %v743, 2.0
      %v776 = vadd.f32 %v744, 2.0
      %v777 = vadd.f32 %v745, 2.0
      %v778 = vadd.f32 %v746, 2.0
      %v779 = vadd.f32 %v747, 2.0
      %v780 = vadd.f32 %v748, 2.0
      %v781 = vadd.f32 %v749, 2.0
      %v782 = vadd.f32 %v750, 2.0
      %v783 = vadd.f32 %v751, 2.0
      %v784 = vadd.f32 %v752, 2.0
      %v785 = vadd.f32 %v753, 2.0
      %v786 = vrcp.pop %v754
      %v787 = vrcp.pop %v755
      %v788 = vrcp.pop %v756
      %v789 = vrcp.pop %v757
      %v790 = vrcp.pop %v758
      %v791 = vrcp.pop %v759
      %v792 = vrcp.pop %v760
      %v793 = vrcp.pop %v761
      %v794 = vrcp.pop %v762
      %v795 = vrcp.pop %v763
      %v796 = vrcp.pop %v764
      %v797 = vrcp.pop %v765
      %v798 = vrcp.pop %v766
      %v799 = vrcp.pop %v767
      %v800 = vrcp.pop %v768
      %v801 = vrcp.pop %v769
      %v802 = vrcp.pop %v770
      %v803 = vrcp.pop %v771
      %v804 = vrcp.pop %v772
      %v805 = vrcp.pop %v773
      %v806 = vrcp.pop %v774
      %v807 = vrcp.pop %v775
      %v808 = vrcp.pop %v776
      %v809 = vrcp.pop %v777
      %v810 = vrcp.pop %v778
      %v811 = vrcp.pop %v779
      %v812 = vrcp.pop %v780
      %v813 = vrcp.pop %v781
      %v814 = vrcp.pop %v782
      %v815 = vrcp.pop %v783
      %v816 = vrcp.pop %v784
      %v817 = vrcp.pop %v785
      %v818 = vmul.f32 %v722, %v786
      %v819 = vmul.f32 %v723, %v787
      %v820 = vmul.f32 %v724, %v788
      %v821 = vmul.f32 %v725, %v789
      %v822 = vmul.f32 %v726, %v790
      %v823 = vmul.f32 %v727, %v791
      %v824 = vmul.f32 %v728, %v792
      %v825 = vmul.f32 %v729, %v793
      %v826 = vmul.f32 %v730, %v794
      %v827 = vmul.f32 %v731, %v795
      %v828 = vmul.f32 %v732, %v796
      %v829 = vmul.f32 %v733, %v797
      %v830 = vmul.f32 %v734, %v798
      %v831 = vmul.f32 %v735, %v799
      %v832 = vmul.f32 %v736, %v800
      %v833 = vmul.f32 %v737, %v801
      %v834 = vmul.f32 %v738, %v802
      %v835 = vmul.f32 %v739, %v803
      %v836 = vmul.f32 %v740, %v804
      %v837 = vmul.f32 %v741, %v805
      %v838 = vmul.f32 %v742, %v806
      %v839 = vmul.f32 %v743, %v807
      %v840 = vmul.f32 %v744, %v808
      %v841 = vmul.f32 %v745, %v809
      %v842 = vmul.f32 %v746, %v810
      %v843 = vmul.f32 %v747, %v811
      %v844 = vmul.f32 %v748, %v812
      %v845 = vmul.f32 %v749, %v813
      %v846 = vmul.f32 %v750, %v814
      %v847 = vmul.f32 %v751, %v815
      %v848 = vmul.f32 %v752, %v816
      %v849 = vmul.f32 %v753, %v817
      %v850 = vmul.f32 %v436, %v818
      %v851 = vmul.f32 %v441, %v819
      %v852 = vmul.f32 %v446, %v820
      %v853 = vmul.f32 %v451, %v821
      %v854 = vmul.f32 %v456, %v822
      %v855 = vmul.f32 %v461, %v823
      %v856 = vmul.f32 %v466, %v824
      %v857 = vmul.f32 %v471, %v825
      %v858 = vmul.f32 %v476, %v826
      %v859 = vmul.f32 %v481, %v827
      %v860 = vmul.f32 %v486, %v828
      %v861 = vmul.f32 %v491, %v829
      %v862 = vmul.f32 %v496, %v830
      %v863 = vmul.f32 %v501, %v831
      %v864 = vmul.f32 %v506, %v832
      %v865 = vmul.f32 %v511, %v833
      %v866 = vmul.f32 %v516, %v834
      %v867 = vmul.f32 %v521, %v835
      %v868 = vmul.f32 %v526, %v836
      %v869 = vmul.f32 %v531, %v837
      %v870 = vmul.f32 %v536, %v838
      %v871 = vmul.f32 %v541, %v839
      %v872 = vmul.f32 %v546, %v840
      %v873 = vmul.f32 %v551, %v841
      %v874 = vmul.f32 %v556, %v842
      %v875 = vmul.f32 %v561, %v843
      %v876 = vmul.f32 %v566, %v844
      %v877 = vmul.f32 %v571, %v845
      %v878 = vmul.f32 %v576, %v846
      %v879 = vmul.f32 %v581, %v847
      %v880 = vmul.f32 %v586, %v848
      %v881 = vmul.f32 %v591, %v849
      %v882 = vld [vmem:[%s3] sm:$0xff]
      %v883 = vld [vmem:[%s3 + $0x8] sm:$0xff]
      %v884 = vld [vmem:[%s3 + $0x10] sm:$0xff]
      %v885 = vld [vmem:[%s3 + $0x18] sm:$0xff]
      %v886 = vld [vmem:[%s3 + $0x20] sm:$0xff]
      %v887 = vld [vmem:[%s3 + $0x28] sm:$0xff]
      %v888 = vld [vmem:[%s3 + $0x30] sm:$0xff]
      %v889 = vld [vmem:[%s3 + $0x38] sm:$0xff]
      %v890 = vld [vmem:[%s4] sm:$0x1]
      %v892 = vlaneseq
      %v893 = vshrl.u32 %v892, 7
      %v894 = vsub.s32 0, %v893
      %v895 = vrot.slane %v890, %v894
      %vm897 = vcmask 523264
      %v899 = vsel %vm897, %v850, 0
      %v902 = vsel %vm897, %v851, 0
      %v905 = vsel %vm897, %v852, 0
      %v908 = vsel %vm897, %v853, 0
      %v911 = vsel %vm897, %v854, 0
      %v914 = vsel %vm897, %v855, 0
      %v917 = vsel %vm897, %v856, 0
      %v920 = vsel %vm897, %v857, 0
      %v923 = vsel %vm897, %v858, 0
      %v926 = vsel %vm897, %v859, 0
      %v929 = vsel %vm897, %v860, 0
      %v932 = vsel %vm897, %v861, 0
      %v935 = vsel %vm897, %v862, 0
      %v938 = vsel %vm897, %v863, 0
      %v941 = vsel %vm897, %v864, 0
      %v944 = vsel %vm897, %v865, 0
      %v947 = vsel %vm897, %v866, 0
      %v950 = vsel %vm897, %v867, 0
      %v953 = vsel %vm897, %v868, 0
      %v956 = vsel %vm897, %v869, 0
      %v959 = vsel %vm897, %v870, 0
      %v962 = vsel %vm897, %v871, 0
      %v965 = vsel %vm897, %v872, 0
      %v968 = vsel %vm897, %v873, 0
      %v971 = vsel %vm897, %v874, 0
      %v974 = vsel %vm897, %v875, 0
      %v977 = vsel %vm897, %v876, 0
      %v980 = vsel %vm897, %v877, 0
      %v983 = vsel %vm897, %v878, 0
      %v986 = vsel %vm897, %v879, 0
      %v989 = vsel %vm897, %v880, 0
      %v992 = vsel %vm897, %v881, 0
      %994 = vmatprep.subr.mxu0 0.0
      %995 = vmatpush1.msra.mxu0 0.0
      %996 = vmatprep.subr.mxu0 0.0
      %997 = vmatpush1.msra.mxu0 0.0
      %998 = vmatprep.subr.mxu0 0.0
      %999 = vmatpush1.msra.mxu0 0.0
      %1000 = vmatprep.subr.mxu0 0.0
      %1001 = vmatpush1.msra.mxu0 0.0
      %1002 = vmatprep.subr.mxu0 0.0
      %1003 = vmatpush1.msra.mxu0 0.0
      %1004 = vmatprep.subr.mxu0 0.0
      %1005 = vmatpush1.msra.mxu0 0.0
      %1006 = vmatprep.subr.mxu0 0.0
      %1007 = vmatpush1.msra.mxu0 0.0
      %1008 = vmatprep.subr.mxu0 0.0
      %1009 = vmatpush1.msra.mxu0 0.0
      %1010 = vmatprep.subr.mxu0 0.0
      %1011 = vmatpush1.msra.mxu0 %v889
      %1012 = vmatprep.subr.mxu0 0.0
      %1013 = vmatpush1.msra.mxu0 %v888
      %1014 = vmatprep.subr.mxu0 0.0
      %1015 = vmatpush1.msra.mxu0 %v887
      %1016 = vmatprep.subr.mxu0 0.0
      %1017 = vmatpush1.msra.mxu0 %v886
      %1018 = vmatprep.subr.mxu0 0.0
      %1019 = vmatpush1.msra.mxu0 %v885
      %1020 = vmatprep.subr.mxu0 0.0
      %1021 = vmatpush1.msra.mxu0 %v884
      %1022 = vmatprep.subr.mxu0 0.0
      %1023 = vmatpush1.msra.mxu0 %v883
      %1024 = vmatprep.subr.mxu0 0.0
      %1025 = vmatpush1.msra.mxu0 %v882
      %1026 = vmatprep.subr.mxu0 0.0
      %1027 = vmatpush2.msra.mxu0 0.0
      %1028 = vmatprep.subr.mxu0 0.0
      %1029 = vmatpush2.msra.mxu0 0.0
      %1030 = vmatprep.subr.mxu0 0.0
      %1031 = vmatpush2.msra.mxu0 0.0
      %1032 = vmatprep.subr.mxu0 0.0
      %1033 = vmatpush2.msra.mxu0 0.0
      %1034 = vmatprep.subr.mxu0 0.0
      %1035 = vmatpush2.msra.mxu0 0.0
      %1036 = vmatprep.subr.mxu0 0.0
      %1037 = vmatpush2.msra.mxu0 0.0
      %1038 = vmatprep.subr.mxu0 0.0
      %1039 = vmatpush2.msra.mxu0 0.0
      %1040 = vmatprep.subr.mxu0 0.0
      %1041 = vmatpush2.msra.mxu0 0.0
      %1042 = vmatprep.subr.mxu0 0.0
      %1043 = vmatpush2.msra.mxu0 0.0
      %1044 = vmatprep.subr.mxu0 0.0
      %1045 = vmatpush2.msra.mxu0 0.0
      %1046 = vmatprep.subr.mxu0 0.0
      %1047 = vmatpush2.msra.mxu0 0.0
      %1048 = vmatprep.subr.mxu0 0.0
      %1049 = vmatpush2.msra.mxu0 0.0
      %1050 = vmatprep.subr.mxu0 0.0
      %1051 = vmatpush2.msra.mxu0 0.0
      %1052 = vmatprep.subr.mxu0 0.0
      %1053 = vmatpush2.msra.mxu0 0.0
      %1054 = vmatprep.subr.mxu0 0.0
      %1055 = vmatpush2.msra.mxu0 0.0
      %1056 = vmatprep.subr.mxu0 0.0
      %1057 = vmatpush2.msra.mxu0 0.0
      %1058 = vmatprep.mubr.f32.mxu0 0.0
      %1059 = vmatmul.mubr.f32.gmra.mxu0 %v899
      %v1060 = vpop.f32.mrf.mxu0
      %v1061 = vadd.f32 %v895, %v1060
      %v1062 = vpop.f32.mrf.mxu0
      %1063 = vmatprep.mubr.f32.mxu0 0.0
      %1064 = vmatmul.mubr.f32.gmra.mxu0 %v902
      %v1065 = vpop.f32.mrf.mxu0
      %v1066 = vadd.f32 %v895, %v1065
      %v1067 = vpop.f32.mrf.mxu0
      %1068 = vmatprep.mubr.f32.mxu0 0.0
      %1069 = vmatmul.mubr.f32.gmra.mxu0 %v905
      %v1070 = vpop.f32.mrf.mxu0
      %v1071 = vadd.f32 %v895, %v1070
      %v1072 = vpop.f32.mrf.mxu0
      %1073 = vmatprep.mubr.f32.mxu0 0.0
      %1074 = vmatmul.mubr.f32.gmra.mxu0 %v908
      %v1075 = vpop.f32.mrf.mxu0
      %v1076 = vadd.f32 %v895, %v1075
      %v1077 = vpop.f32.mrf.mxu0
      %1078 = vmatprep.mubr.f32.mxu0 0.0
      %1079 = vmatmul.mubr.f32.gmra.mxu0 %v911
      %v1080 = vpop.f32.mrf.mxu0
      %v1081 = vadd.f32 %v895, %v1080
      %v1082 = vpop.f32.mrf.mxu0
      %1083 = vmatprep.mubr.f32.mxu0 0.0
      %1084 = vmatmul.mubr.f32.gmra.mxu0 %v914
      %v1085 = vpop.f32.mrf.mxu0
      %v1086 = vadd.f32 %v895, %v1085
      %v1087 = vpop.f32.mrf.mxu0
      %1088 = vmatprep.mubr.f32.mxu0 0.0
      %1089 = vmatmul.mubr.f32.gmra.mxu0 %v917
      %v1090 = vpop.f32.mrf.mxu0
      %v1091 = vadd.f32 %v895, %v1090
      %v1092 = vpop.f32.mrf.mxu0
      %1093 = vmatprep.mubr.f32.mxu0 0.0
      %1094 = vmatmul.mubr.f32.gmra.mxu0 %v920
      %v1095 = vpop.f32.mrf.mxu0
      %v1096 = vadd.f32 %v895, %v1095
      %v1097 = vpop.f32.mrf.mxu0
      %1098 = vmatprep.mubr.f32.mxu0 0.0
      %1099 = vmatmul.mubr.f32.gmra.mxu0 %v923
      %v1100 = vpop.f32.mrf.mxu0
      %v1101 = vadd.f32 %v895, %v1100
      %v1102 = vpop.f32.mrf.mxu0
      %1103 = vmatprep.mubr.f32.mxu0 0.0
      %1104 = vmatmul.mubr.f32.gmra.mxu0 %v926
      %v1105 = vpop.f32.mrf.mxu0
      %v1106 = vadd.f32 %v895, %v1105
      %v1107 = vpop.f32.mrf.mxu0
      %1108 = vmatprep.mubr.f32.mxu0 0.0
      %1109 = vmatmul.mubr.f32.gmra.mxu0 %v929
      %v1110 = vpop.f32.mrf.mxu0
      %v1111 = vadd.f32 %v895, %v1110
      %v1112 = vpop.f32.mrf.mxu0
      %1113 = vmatprep.mubr.f32.mxu0 0.0
      %1114 = vmatmul.mubr.f32.gmra.mxu0 %v932
      %v1115 = vpop.f32.mrf.mxu0
      %v1116 = vadd.f32 %v895, %v1115
      %v1117 = vpop.f32.mrf.mxu0
      %1118 = vmatprep.mubr.f32.mxu0 0.0
      %1119 = vmatmul.mubr.f32.gmra.mxu0 %v935
      %v1120 = vpop.f32.mrf.mxu0
      %v1121 = vadd.f32 %v895, %v1120
      %v1122 = vpop.f32.mrf.mxu0
      %1123 = vmatprep.mubr.f32.mxu0 0.0
      %1124 = vmatmul.mubr.f32.gmra.mxu0 %v938
      %v1125 = vpop.f32.mrf.mxu0
      %v1126 = vadd.f32 %v895, %v1125
      %v1127 = vpop.f32.mrf.mxu0
      %1128 = vmatprep.mubr.f32.mxu0 0.0
      %1129 = vmatmul.mubr.f32.gmra.mxu0 %v941
      %v1130 = vpop.f32.mrf.mxu0
      %v1131 = vadd.f32 %v895, %v1130
      %v1132 = vpop.f32.mrf.mxu0
      %1133 = vmatprep.mubr.f32.mxu0 0.0
      %1134 = vmatmul.mubr.f32.gmra.mxu0 %v944
      %v1135 = vpop.f32.mrf.mxu0
      %v1136 = vadd.f32 %v895, %v1135
      %v1137 = vpop.f32.mrf.mxu0
      %1138 = vmatprep.mubr.f32.mxu0 0.0
      %1139 = vmatmul.mubr.f32.gmra.mxu0 %v947
      %v1140 = vpop.f32.mrf.mxu0
      %v1141 = vadd.f32 %v895, %v1140
      %v1142 = vpop.f32.mrf.mxu0
      %1143 = vmatprep.mubr.f32.mxu0 0.0
      %1144 = vmatmul.mubr.f32.gmra.mxu0 %v950
      %v1145 = vpop.f32.mrf.mxu0
      %v1146 = vadd.f32 %v895, %v1145
      %v1147 = vpop.f32.mrf.mxu0
      %1148 = vmatprep.mubr.f32.mxu0 0.0
      %1149 = vmatmul.mubr.f32.gmra.mxu0 %v953
      %v1150 = vpop.f32.mrf.mxu0
      %v1151 = vadd.f32 %v895, %v1150
      %v1152 = vpop.f32.mrf.mxu0
      %1153 = vmatprep.mubr.f32.mxu0 0.0
      %1154 = vmatmul.mubr.f32.gmra.mxu0 %v956
      %v1155 = vpop.f32.mrf.mxu0
      %v1156 = vadd.f32 %v895, %v1155
      %v1157 = vpop.f32.mrf.mxu0
      %1158 = vmatprep.mubr.f32.mxu0 0.0
      %1159 = vmatmul.mubr.f32.gmra.mxu0 %v959
      %v1160 = vpop.f32.mrf.mxu0
      %v1161 = vadd.f32 %v895, %v1160
      %v1162 = vpop.f32.mrf.mxu0
      %1163 = vmatprep.mubr.f32.mxu0 0.0
      %1164 = vmatmul.mubr.f32.gmra.mxu0 %v962
      %v1165 = vpop.f32.mrf.mxu0
      %v1166 = vadd.f32 %v895, %v1165
      %v1167 = vpop.f32.mrf.mxu0
      %1168 = vmatprep.mubr.f32.mxu0 0.0
      %1169 = vmatmul.mubr.f32.gmra.mxu0 %v965
      %v1170 = vpop.f32.mrf.mxu0
      %v1171 = vadd.f32 %v895, %v1170
      %v1172 = vpop.f32.mrf.mxu0
      %1173 = vmatprep.mubr.f32.mxu0 0.0
      %1174 = vmatmul.mubr.f32.gmra.mxu0 %v968
      %v1175 = vpop.f32.mrf.mxu0
      %v1176 = vadd.f32 %v895, %v1175
      %v1177 = vpop.f32.mrf.mxu0
      %1178 = vmatprep.mubr.f32.mxu0 0.0
      %1179 = vmatmul.mubr.f32.gmra.mxu0 %v971
      %v1180 = vpop.f32.mrf.mxu0
      %v1181 = vadd.f32 %v895, %v1180
      %v1182 = vpop.f32.mrf.mxu0
      %1183 = vmatprep.mubr.f32.mxu0 0.0
      %1184 = vmatmul.mubr.f32.gmra.mxu0 %v974
      %v1185 = vpop.f32.mrf.mxu0
      %v1186 = vadd.f32 %v895, %v1185
      %v1187 = vpop.f32.mrf.mxu0
      %1188 = vmatprep.mubr.f32.mxu0 0.0
      %1189 = vmatmul.mubr.f32.gmra.mxu0 %v977
      %v1190 = vpop.f32.mrf.mxu0
      %v1191 = vadd.f32 %v895, %v1190
      %v1192 = vpop.f32.mrf.mxu0
      %1193 = vmatprep.mubr.f32.mxu0 0.0
      %1194 = vmatmul.mubr.f32.gmra.mxu0 %v980
      %v1195 = vpop.f32.mrf.mxu0
      %v1196 = vadd.f32 %v895, %v1195
      %v1197 = vpop.f32.mrf.mxu0
      %1198 = vmatprep.mubr.f32.mxu0 0.0
      %1199 = vmatmul.mubr.f32.gmra.mxu0 %v983
      %v1200 = vpop.f32.mrf.mxu0
      %v1201 = vadd.f32 %v895, %v1200
      %v1202 = vpop.f32.mrf.mxu0
      %1203 = vmatprep.mubr.f32.mxu0 0.0
      %1204 = vmatmul.mubr.f32.gmra.mxu0 %v986
      %v1205 = vpop.f32.mrf.mxu0
      %v1206 = vadd.f32 %v895, %v1205
      %v1207 = vpop.f32.mrf.mxu0
      %1208 = vmatprep.mubr.f32.mxu0 0.0
      %1209 = vmatmul.mubr.f32.gmra.mxu0 %v989
      %v1210 = vpop.f32.mrf.mxu0
      %v1211 = vadd.f32 %v895, %v1210
      %v1212 = vpop.f32.mrf.mxu0
      %1213 = vmatprep.mubr.f32.mxu0 0.0
      %1214 = vmatmul.mubr.f32.gmra.mxu0 %v992
      %v1215 = vpop.f32.mrf.mxu0
      %v1216 = vadd.f32 %v895, %v1215
      %v1217 = vpop.f32.mrf.mxu0
      %1218 = vdwg.mxu0
      %1251 = vrot.lane.b32.xlu0 %v1061, 4
      %v1252 = vpop.permute.xlu0 %1251
      %1253 = vrot.lane.b32.xlu0 %v1066, 4
      %v1254 = vpop.permute.xlu0 %1253
      %1255 = vrot.lane.b32.xlu0 %v1071, 4
      %v1256 = vpop.permute.xlu0 %1255
      %1257 = vrot.lane.b32.xlu0 %v1076, 4
      %v1258 = vpop.permute.xlu0 %1257
      %1259 = vrot.lane.b32.xlu0 %v1081, 4
      %v1260 = vpop.permute.xlu0 %1259
      %1261 = vrot.lane.b32.xlu0 %v1086, 4
      %v1262 = vpop.permute.xlu0 %1261
      %1263 = vrot.lane.b32.xlu0 %v1091, 4
      %v1264 = vpop.permute.xlu0 %1263
      %1265 = vrot.lane.b32.xlu0 %v1096, 4
      %v1266 = vpop.permute.xlu0 %1265
      %1267 = vrot.lane.b32.xlu0 %v1101, 4
      %v1268 = vpop.permute.xlu0 %1267
      %1269 = vrot.lane.b32.xlu0 %v1106, 4
      %v1270 = vpop.permute.xlu0 %1269
      %1271 = vrot.lane.b32.xlu0 %v1111, 4
      %v1272 = vpop.permute.xlu0 %1271
      %1273 = vrot.lane.b32.xlu0 %v1116, 4
      %v1274 = vpop.permute.xlu0 %1273
      %1275 = vrot.lane.b32.xlu0 %v1121, 4
      %v1276 = vpop.permute.xlu0 %1275
      %1277 = vrot.lane.b32.xlu0 %v1126, 4
      %v1278 = vpop.permute.xlu0 %1277
      %1279 = vrot.lane.b32.xlu0 %v1131, 4
      %v1280 = vpop.permute.xlu0 %1279
      %1281 = vrot.lane.b32.xlu0 %v1136, 4
      %v1282 = vpop.permute.xlu0 %1281
      %1283 = vrot.lane.b32.xlu0 %v1141, 4
      %v1284 = vpop.permute.xlu0 %1283
      %1285 = vrot.lane.b32.xlu0 %v1146, 4
      %v1286 = vpop.permute.xlu0 %1285
      %1287 = vrot.lane.b32.xlu0 %v1151, 4
      %v1288 = vpop.permute.xlu0 %1287
      %1289 = vrot.lane.b32.xlu0 %v1156, 4
      %v1290 = vpop.permute.xlu0 %1289
      %1291 = vrot.lane.b32.xlu0 %v1161, 4
      %v1292 = vpop.permute.xlu0 %1291
      %1293 = vrot.lane.b32.xlu0 %v1166, 4
      %v1294 = vpop.permute.xlu0 %1293
      %1295 = vrot.lane.b32.xlu0 %v1171, 4
      %v1296 = vpop.permute.xlu0 %1295
      %1297 = vrot.lane.b32.xlu0 %v1176, 4
      %v1298 = vpop.permute.xlu0 %1297
      %1299 = vrot.lane.b32.xlu0 %v1181, 4
      %v1300 = vpop.permute.xlu0 %1299
      %1301 = vrot.lane.b32.xlu0 %v1186, 4
      %v1302 = vpop.permute.xlu0 %1301
      %1303 = vrot.lane.b32.xlu0 %v1191, 4
      %v1304 = vpop.permute.xlu0 %1303
      %1305 = vrot.lane.b32.xlu0 %v1196, 4
      %v1306 = vpop.permute.xlu0 %1305
      %1307 = vrot.lane.b32.xlu0 %v1201, 4
      %v1308 = vpop.permute.xlu0 %1307
      %1309 = vrot.lane.b32.xlu0 %v1206, 4
      %v1310 = vpop.permute.xlu0 %1309
      %1311 = vrot.lane.b32.xlu0 %v1211, 4
      %v1312 = vpop.permute.xlu0 %1311
      %1313 = vrot.lane.b32.xlu0 %v1216, 4
      %v1314 = vpop.permute.xlu0 %1313
      %v1347 = vsel %vm268, %v228, %v1252
      %v1348 = vsel %vm268, %v229, %v1254
      %v1349 = vsel %vm268, %v230, %v1256
      %v1350 = vsel %vm268, %v231, %v1258
      %v1351 = vsel %vm268, %v232, %v1260
      %v1352 = vsel %vm268, %v233, %v1262
      %v1353 = vsel %vm268, %v234, %v1264
      %v1354 = vsel %vm268, %v235, %v1266
      %v1355 = vsel %vm268, %v236, %v1268
      %v1356 = vsel %vm268, %v237, %v1270
      %v1357 = vsel %vm268, %v238, %v1272
      %v1358 = vsel %vm268, %v239, %v1274
      %v1359 = vsel %vm268, %v240, %v1276
      %v1360 = vsel %vm268, %v241, %v1278
      %v1361 = vsel %vm268, %v242, %v1280
      %v1362 = vsel %vm268, %v243, %v1282
      %v1363 = vsel %vm268, %v244, %v1284
      %v1364 = vsel %vm268, %v245, %v1286
      %v1365 = vsel %vm268, %v246, %v1288
      %v1366 = vsel %vm268, %v247, %v1290
      %v1367 = vsel %vm268, %v248, %v1292
      %v1368 = vsel %vm268, %v249, %v1294
      %v1369 = vsel %vm268, %v250, %v1296
      %v1370 = vsel %vm268, %v251, %v1298
      %v1371 = vsel %vm268, %v252, %v1300
      %v1372 = vsel %vm268, %v253, %v1302
      %v1373 = vsel %vm268, %v254, %v1304
      %v1374 = vsel %vm268, %v255, %v1306
      %v1375 = vsel %vm268, %v256, %v1308
      %v1376 = vsel %vm268, %v257, %v1310
      %v1377 = vsel %vm268, %v258, %v1312
      %v1378 = vsel %vm268, %v259, %v1314
      %vm1379 = vcmask 64512
      %1380 = vst.msk [vmem:[%s226] sm:$0xff] %vm1379, %v1347
      %1381 = vst.msk [vmem:[%s226 + $0x8] sm:$0xff] %vm1379, %v1348
      %1382 = vst.msk [vmem:[%s226 + $0x10] sm:$0xff] %vm1379, %v1349
      %1383 = vst.msk [vmem:[%s226 + $0x18] sm:$0xff] %vm1379, %v1350
      %1384 = vst.msk [vmem:[%s226 + $0x20] sm:$0xff] %vm1379, %v1351
      %1385 = vst.msk [vmem:[%s226 + $0x28] sm:$0xff] %vm1379, %v1352
      %1386 = vst.msk [vmem:[%s226 + $0x30] sm:$0xff] %vm1379, %v1353
      %1387 = vst.msk [vmem:[%s226 + $0x38] sm:$0xff] %vm1379, %v1354
      %1388 = vst.msk [vmem:[%s226 + $0x40] sm:$0xff] %vm1379, %v1355
      %1389 = vst.msk [vmem:[%s226 + $0x48] sm:$0xff] %vm1379, %v1356
      %1390 = vst.msk [vmem:[%s226 + $0x50] sm:$0xff] %vm1379, %v1357
      %1391 = vst.msk [vmem:[%s226 + $0x58] sm:$0xff] %vm1379, %v1358
      %1392 = vst.msk [vmem:[%s226 + $0x60] sm:$0xff] %vm1379, %v1359
      %1393 = vst.msk [vmem:[%s226 + $0x68] sm:$0xff] %vm1379, %v1360
      %1394 = vst.msk [vmem:[%s226 + $0x70] sm:$0xff] %vm1379, %v1361
      %1395 = vst.msk [vmem:[%s226 + $0x78] sm:$0xff] %vm1379, %v1362
      %1396 = vst.msk [vmem:[%s226 + $0x80] sm:$0xff] %vm1379, %v1363
      %1397 = vst.msk [vmem:[%s226 + $0x88] sm:$0xff] %vm1379, %v1364
      %1398 = vst.msk [vmem:[%s226 + $0x90] sm:$0xff] %vm1379, %v1365
      %1399 = vst.msk [vmem:[%s226 + $0x98] sm:$0xff] %vm1379, %v1366
      %1400 = vst.msk [vmem:[%s226 + $0xa0] sm:$0xff] %vm1379, %v1367
      %1401 = vst.msk [vmem:[%s226 + $0xa8] sm:$0xff] %vm1379, %v1368
      %1402 = vst.msk [vmem:[%s226 + $0xb0] sm:$0xff] %vm1379, %v1369
      %1403 = vst.msk [vmem:[%s226 + $0xb8] sm:$0xff] %vm1379, %v1370
      %1404 = vst.msk [vmem:[%s226 + $0xc0] sm:$0xff] %vm1379, %v1371
      %1405 = vst.msk [vmem:[%s226 + $0xc8] sm:$0xff] %vm1379, %v1372
      %1406 = vst.msk [vmem:[%s226 + $0xd0] sm:$0xff] %vm1379, %v1373
      %1407 = vst.msk [vmem:[%s226 + $0xd8] sm:$0xff] %vm1379, %v1374
      %1408 = vst.msk [vmem:[%s226 + $0xe0] sm:$0xff] %vm1379, %v1375
      %1409 = vst.msk [vmem:[%s226 + $0xe8] sm:$0xff] %vm1379, %v1376
      %1410 = vst.msk [vmem:[%s226 + $0xf0] sm:$0xff] %vm1379, %v1377
      %1411 = vst.msk [vmem:[%s226 + $0xf8] sm:$0xff] %vm1379, %v1378
      %s1412 = smul.u32 32, %s16
      %p1413 = scmp.lt.s32.totalorder %s1412, 127
      %s1414 = scalar_select %p1413, %s1412, 127
      %s1415 = smul.addr %s1414, 8
      %s1416 = scalar_lea.vmem %s5, %s1415
      // Predicated region
      $region41: #{tpu_custom_call.1} parent=39 // pred_check
        %p1417 = pneg %p144
      $region42: #{tpu_custom_call.1} parent=39 // pred_check_branch
        %1419 = sbr.rel (%p1417) target = $region44
      $region43: #{tpu_custom_call.1} parent=39 // pred_region
        %s1420 = smul.u32 32, %s16
      $region44: #{tpu_custom_call.1} parent=39 // pred_fallthru
        _
    $region40: #{tpu_custom_call.1} parent=5 // pred_fallthru
      _
    %p1421 = scmp.le.s32.totalorder 2, %s11
    // Predicated region
    $region45: #{tpu_custom_call.1} parent=5 // pred_check
      %p1422 = pneg %p1421
    $region46: #{tpu_custom_call.1} parent=5 // pred_check_branch
      %1424 = sbr.rel (%p1422) target = $region48
    $region47: #{tpu_custom_call.1} parent=5 // pred_region
      %s1425 = ssub.s32 %s11, 2
      // Predicated region
      $region49: #{tpu_custom_call.1} parent=47 // pred_check
        %p1426 = pneg %p150
      $region50: #{tpu_custom_call.1} parent=47 // pred_check_branch
        %1428 = sbr.rel (%p1426) target = $region52
      $region51: #{tpu_custom_call.1} parent=47 // pred_region
        %s1429 = smul.u32 32, %s17
        %p1430 = scmp.lt.s32.totalorder %s1429, 127
        %s1431 = scalar_select %p1430, %s1429, 127
        %s1432 = smul.addr %s1431, 8
        %s1433 = scalar_lea.vmem %s5, %s1432
      $region52: #{tpu_custom_call.1} parent=47 // pred_fallthru
        _
    $region48: #{tpu_custom_call.1} parent=5 // pred_fallthru
      _
  $region6: #{tpu_custom_call.1} parent=0 // loop_footer
    %s15 = sadd.s32 1, %s11
  $region7: #{tpu_custom_call.1} parent=0 // loop_footer_branch
    %10 = sbr.rel target = $region3
  $region8: #{tpu_custom_call.1} parent=0 // loop_exit
    _

</llo_original>
